<compile_context>
chip_gen: v7x
topology: tpu7x:2x2x1
jax: 0.10.0
libtpu: 0.0.40
codegen_flags: <defaults>
</compile_context>

<pallas_src>
import jax
import jax.numpy as jnp
from jax.experimental import pallas as pl
from jax.experimental.pallas import tpu as pltpu


def sablk_kernel(x_ref, w_ref, b_ref, o_ref):
    # x_ref: (TB, C, L) VMEM   w_ref: (6,) SMEM   b_ref: (1,) SMEM   o_ref: (TB, C, L) VMEM
    x = x_ref[...].astype(jnp.float32)              # (TB, C, L)
    TB, C, L = x.shape

    # Channel-wise mean & max (PyTorch dim=1, keepdim handled by re-expanding later).
    x_mean = jnp.mean(x, axis=1)                    # (TB, L)
    x_max = jnp.max(x, axis=1)                      # (TB, L)

    # Conv1d(in=2, out=1, kernel=3, padding=1), cross-correlation:
    #   conv[l] = b + sum_c (w[c,0]*feat[c,l-1] + w[c,1]*feat[c,l] + w[c,2]*feat[c,l+1])
    # Weights/bias are scalars in SMEM; taps applied as scalar * vector FMAs.
    w00, w01, w02 = w_ref[0], w_ref[1], w_ref[2]    # taps on the mean row (l-1, l, l+1)
    w10, w11, w12 = w_ref[3], w_ref[4], w_ref[5]    # taps on the max row  (l-1, l, l+1)
    bias = b_ref[0]

    zcol = jnp.zeros((TB, 1), jnp.float32)

    def left(v):    # v[:, l-1], zero-padded at l = 0
        return jnp.concatenate([zcol, v[:, : L - 1]], axis=1)

    def right(v):   # v[:, l+1], zero-padded at l = L-1
        return jnp.concatenate([v[:, 1:], zcol], axis=1)

    conv = (w00 * left(x_mean) + w01 * x_mean + w02 * right(x_mean)
            + w10 * left(x_max) + w11 * x_max + w12 * right(x_max)
            + bias)                                  # (TB, L)

    att = jax.nn.sigmoid(conv)                       # (TB, L)
    o_ref[...] = (x * att[:, None, :]).astype(o_ref.dtype)


def _pick_tile_b(B, per_batch_bytes, target_bytes=4 << 20):
    """Largest divisor of B whose (TB, C, L) tile stays within ~target_bytes.

    Prefers keeping >= 2 grid steps (v7x has 2 TensorCores to shard the 'parallel' axis
    across) whenever the whole batch would otherwise fit in a single tile.
    """
    cap = max(1, min(B, target_bytes // max(per_batch_bytes, 1)))
    if B >= 2 and cap >= B:
        cap = max(1, (B + 1) // 2)
    tb = 1
    for d in range(1, cap + 1):
        if B % d == 0:
            tb = d
    return tb


def sablk_forward(x, conv_w, conv_b):
    """x: (B, C, L); conv_w: (1, 2, 3); conv_b: (1,)."""
    B, C, L = x.shape
    w_flat = conv_w.reshape(6).astype(jnp.float32)   # [mean taps (l-1,l,l+1), max taps (l-1,l,l+1)]
    b_flat = conv_b.reshape(1).astype(jnp.float32)

    itemsize = jnp.dtype(x.dtype).itemsize
    tb = _pick_tile_b(B, C * L * itemsize)
    grid_b = B // tb

    # Double-buffered input + output tiles, plus slack for the tiny SMEM operands.
    tile_bytes = tb * C * L * itemsize
    vmem_limit = int(min(max(4 * tile_bytes + (1 << 20), 16 << 20), 64 << 20))

    return pl.pallas_call(
        sablk_kernel,
        out_shape=jax.ShapeDtypeStruct((B, C, L), x.dtype),
        grid_spec=pltpu.PrefetchScalarGridSpec(
            num_scalar_prefetch=0,
            grid=(grid_b,),
            in_specs=[
                pl.BlockSpec((tb, C, L), lambda b: (b, 0, 0)),
                pl.BlockSpec(memory_space=pltpu.MemorySpace.SMEM),
                pl.BlockSpec(memory_space=pltpu.MemorySpace.SMEM),
            ],
            out_specs=pl.BlockSpec((tb, C, L), lambda b: (b, 0, 0)),
        ),
        compiler_params=pltpu.CompilerParams(
            dimension_semantics=("parallel",),
            vmem_limit_bytes=vmem_limit,
        ),
    )(x, w_flat, b_flat)


def sablk_reference(x, conv_w, conv_b):
    """Pure-JAX reference matching the PyTorch module."""
    x_mean = jnp.mean(x, axis=1, keepdims=True)
    x_max = jnp.max(x, axis=1, keepdims=True)
    feat = jnp.concatenate([x_mean, x_max], axis=1)           # (B, 2, L)
    conv = jax.lax.conv_general_dilated(
        feat, conv_w, window_strides=(1,), padding=((1, 1),),
        dimension_numbers=("NCH", "OIH", "NCH"))
    conv = conv + conv_b.reshape(1, 1, 1)
    return x * jax.nn.sigmoid(conv)


if __name__ == "__main__":
    key = jax.random.PRNGKey(0)
    kx, kw, kb = jax.random.split(key, 3)

    B, C, L = 2, 4, 16
    x = jax.random.normal(kx, (B, C, L), dtype=jnp.float32)

    # Deterministic synthetic Conv1d(2, 1, kernel_size=3) parameters.
    fan_in = 2 * 3
    bound = 1.0 / (fan_in ** 0.5)
    conv_w = jax.random.uniform(kw, (1, 2, 3), jnp.float32, -bound, bound)
    conv_b = jax.random.uniform(kb, (1,), jnp.float32, -bound, bound)

    out = jax.block_until_ready(sablk_forward(x, conv_w, conv_b))

    ref = sablk_reference(x, conv_w, conv_b)
    assert jnp.allclose(out, ref, atol=1e-5, rtol=1e-5), "mismatch vs reference"

    print("KERNEL_OK")
</pallas_src>

<mosaic_0001>
module attributes {stable_mosaic.version = 11 : i64} {
  func.func @sablk_kernel(%arg0: i32, %arg1: memref<1x4x16xf32, #tpu.memory_space<vmem>>, %arg2: memref<6xf32, #tpu.memory_space<smem>>, %arg3: memref<1xf32, #tpu.memory_space<smem>>, %arg4: memref<1x4x16xf32, #tpu.memory_space<vmem>>) attributes {dimension_semantics = [#tpu.dimension_semantics<parallel>], iteration_bounds = array<i64: 2>, scalar_prefetch = 0 : i64, scratch_operands = 0 : i64, tpu.core_type = #tpu.core_type<tc>, window_params = [{transform_indices = @transform_0, window_bounds = array<i64: 1, 4, 16>}, {transform_indices = @transform_1, window_bounds = array<i64: 6>}, {transform_indices = @transform_2, window_bounds = array<i64: 1>}, {transform_indices = @transform_3, window_bounds = array<i64: 1, 4, 16>}]} {
    %c0 = arith.constant 0 : index
    %c0_0 = arith.constant 0 : index
    %c0_1 = arith.constant 0 : index
    %0 = vector.load %arg1[%c0, %c0_0, %c0_1] : memref<1x4x16xf32, #tpu.memory_space<vmem>>, vector<1x4x16xf32>
    %cst = arith.constant dense<0.000000e+00> : vector<1x16xf32>
    %1 = vector.multi_reduction <add>, %0, %cst [1] : vector<1x4x16xf32> to vector<1x16xf32>
    %cst_2 = arith.constant 4.000000e+00 : f32
    %2 = vector.broadcast %cst_2 : f32 to vector<1x16xf32>
    %3 = arith.divf %1, %2 : vector<1x16xf32>
    %cst_3 = arith.constant dense<0xFF800000> : vector<1x16xf32>
    %4 = vector.multi_reduction <maximumf>, %0, %cst_3 [1] : vector<1x4x16xf32> to vector<1x16xf32>
    %c0_4 = arith.constant 0 : index
    %5 = memref.load %arg2[%c0_4] : memref<6xf32, #tpu.memory_space<smem>>
    %c1 = arith.constant 1 : index
    %6 = memref.load %arg2[%c1] : memref<6xf32, #tpu.memory_space<smem>>
    %c2 = arith.constant 2 : index
    %7 = memref.load %arg2[%c2] : memref<6xf32, #tpu.memory_space<smem>>
    %c3 = arith.constant 3 : index
    %8 = memref.load %arg2[%c3] : memref<6xf32, #tpu.memory_space<smem>>
    %c4 = arith.constant 4 : index
    %9 = memref.load %arg2[%c4] : memref<6xf32, #tpu.memory_space<smem>>
    %c5 = arith.constant 5 : index
    %10 = memref.load %arg2[%c5] : memref<6xf32, #tpu.memory_space<smem>>
    %c0_5 = arith.constant 0 : index
    %11 = memref.load %arg3[%c0_5] : memref<1xf32, #tpu.memory_space<smem>>
    %cst_6 = arith.constant 0.000000e+00 : f32
    %12 = vector.broadcast %cst_6 : f32 to vector<1x1xf32>
    %13 = vector.extract_strided_slice %3 {offsets = [0, 0], sizes = [1, 15], strides = [1, 1]} : vector<1x16xf32> to vector<1x15xf32>
    %14 = tpu.concatenate %12, %13 in 1 : vector<1x1xf32>, vector<1x15xf32> -> vector<1x16xf32>
    %15 = vector.broadcast %5 : f32 to vector<1x16xf32>
    %16 = arith.mulf %15, %14 : vector<1x16xf32>
    %17 = vector.broadcast %6 : f32 to vector<1x16xf32>
    %18 = arith.mulf %17, %3 : vector<1x16xf32>
    %19 = arith.addf %16, %18 : vector<1x16xf32>
    %20 = vector.extract_strided_slice %3 {offsets = [0, 1], sizes = [1, 15], strides = [1, 1]} : vector<1x16xf32> to vector<1x15xf32>
    %21 = tpu.concatenate %20, %12 in 1 : vector<1x15xf32>, vector<1x1xf32> -> vector<1x16xf32>
    %22 = vector.broadcast %7 : f32 to vector<1x16xf32>
    %23 = arith.mulf %22, %21 : vector<1x16xf32>
    %24 = arith.addf %19, %23 : vector<1x16xf32>
    %25 = vector.extract_strided_slice %4 {offsets = [0, 0], sizes = [1, 15], strides = [1, 1]} : vector<1x16xf32> to vector<1x15xf32>
    %26 = tpu.concatenate %12, %25 in 1 : vector<1x1xf32>, vector<1x15xf32> -> vector<1x16xf32>
    %27 = vector.broadcast %8 : f32 to vector<1x16xf32>
    %28 = arith.mulf %27, %26 : vector<1x16xf32>
    %29 = arith.addf %24, %28 : vector<1x16xf32>
    %30 = vector.broadcast %9 : f32 to vector<1x16xf32>
    %31 = arith.mulf %30, %4 : vector<1x16xf32>
    %32 = arith.addf %29, %31 : vector<1x16xf32>
    %33 = vector.extract_strided_slice %4 {offsets = [0, 1], sizes = [1, 15], strides = [1, 1]} : vector<1x16xf32> to vector<1x15xf32>
    %34 = tpu.concatenate %33, %12 in 1 : vector<1x15xf32>, vector<1x1xf32> -> vector<1x16xf32>
    %35 = vector.broadcast %10 : f32 to vector<1x16xf32>
    %36 = arith.mulf %35, %34 : vector<1x16xf32>
    %37 = arith.addf %32, %36 : vector<1x16xf32>
    %38 = vector.broadcast %11 : f32 to vector<1x16xf32>
    %39 = arith.addf %37, %38 : vector<1x16xf32>
    %40 = arith.negf %39 : vector<1x16xf32>
    %41 = math.exp %40 : vector<1x16xf32>
    %cst_7 = arith.constant 1.000000e+00 : f32
    %42 = vector.broadcast %cst_7 : f32 to vector<1x16xf32>
    %43 = arith.addf %42, %41 : vector<1x16xf32>
    %44 = arith.divf %42, %43 : vector<1x16xf32>
    %45 = vector.shape_cast %44 : vector<1x16xf32> to vector<1x1x16xf32>
    %46 = vector.broadcast %45 : vector<1x1x16xf32> to vector<1x4x16xf32>
    %47 = arith.mulf %0, %46 : vector<1x4x16xf32>
    %c0_8 = arith.constant 0 : index
    %c0_9 = arith.constant 0 : index
    %c0_10 = arith.constant 0 : index
    %48 = vector.load %arg4[%c0_8, %c0_9, %c0_10] : memref<1x4x16xf32, #tpu.memory_space<vmem>>, vector<1x4x16xf32>
    tpu.vector_store %arg4[%c0_8, %c0_9, %c0_10], %47 {strides = array<i32>} : memref<1x4x16xf32, #tpu.memory_space<vmem>>, vector<1x4x16xf32>,
    return
  }
  func.func @transform_0(%arg0: i32) -> (i32, i32, i32) {
    %c0_i32 = arith.constant 0 : i32
    %c0_i32_0 = arith.constant 0 : i32
    %c0_i32_1 = arith.constant 0 : i32
    return %arg0, %c0_i32, %c0_i32_0 : i32, i32, i32
  }
  func.func @transform_1(%arg0: i32) -> i32 {
    %c0_i32 = arith.constant 0 : i32
    %c0_i32_0 = arith.constant 0 : i32
    return %c0_i32 : i32
  }
  func.func @transform_2(%arg0: i32) -> i32 {
    %c0_i32 = arith.constant 0 : i32
    %c0_i32_0 = arith.constant 0 : i32
    return %c0_i32 : i32
  }
  func.func @transform_3(%arg0: i32) -> (i32, i32, i32) {
    %c0_i32 = arith.constant 0 : i32
    %c0_i32_0 = arith.constant 0 : i32
    %c0_i32_1 = arith.constant 0 : i32
    return %arg0, %c0_i32, %c0_i32_0 : i32, i32, i32
  }
}

</mosaic_0001>

<llo_original>
// kernel: tpu_custom_call.1
$region0: #{tpu_custom_call.1}
  #allocation0 [shape = 'u32[]', space=smem, size = 0x4, offset = 0x4, fixed_abs, tag = 'smem constant byte address 0x4 - core index']
  #allocation1 [shape = 'u32[144,128]{1,0:T(1,128)}', space=vmem, size = 0x12000, scoped, tag = 'internal scratch']
  #allocation2 [shape = 'f32[1]{0:T(128)S(6)}', space=smem, size = 0x200, scoped, tag = 'scoped memory for tpu_custom_call.1']
  %s0 = inlined_call_operand.hbm [shape: f32[2,4,16], index: 0, kind: input, shape index: {}]
  %s1 = inlined_call_operand.vmem [shape: f32[6], index: 1, kind: input, shape index: {}]
  %s2 = inlined_call_operand.<no memory space> [shape: f32[1], index: 2, kind: input, shape index: {}]
  %s3 = inlined_call_operand.hbm [shape: f32[2,4,16], index: 3, kind: output, shape index: {}]
  %s4 = sld [smem:[#allocation0]]
  $region53: #{tpu_custom_call.1} parent=0
    _
  %s6 = ssub.s32 1, %s4
  %s7 = scalar_select 0, %s6, %s4
  %8 = sst [smem:[#allocation2]] %s2
  $region1: #{tpu_custom_call.1} parent=0
    #allocation3 [shape = 'u8[4096]{0}', space=vmem, size = 0x1000, scoped, tag = 'input window, operand 0']
    #allocation4 [shape = 's32[2]{0}', space=sflag, size = 0x8, scoped, tag = 'scoped memory for tpu_custom_call.1']
    #allocation5 [shape = 's32[2]{0}', space=sflag, size = 0x8, scoped, tag = 'scoped memory for tpu_custom_call.1']
    #allocation6 [shape = 's32[2]{0}', space=sflag, size = 0x8, scoped, tag = 'scoped memory for tpu_custom_call.1']
    #allocation7 [shape = 'u8[512]{0}', space=smem, size = 0x200, scoped, tag = 'input window, operand 1, single buffered']
    #allocation8 [shape = 'u8[4096]{0}', space=vmem, size = 0x1000, scoped, tag = 'output window, operand 0']
    %9 = vsyncpa [#allocation4], 0
    %s10 = scalar_lea.sflag [#allocation4], 1
    %11 = vsyncpa %s10, 0
    %12 = vsyncpa [#allocation6], 0
    %13 = vsyncpa [#allocation5], 0
    %s14 = scalar_lea.sflag [#allocation5], 1
    %15 = vsyncpa %s14, 0
    loop: start=0, step=1, limit=4
    $region2: #{tpu_custom_call.1} parent=1 // loop_pre_header
      _
    $region3: #{tpu_custom_call.1} parent=1 // loop_header
      %s17 = sphi 0, %s21
      %p18 = scmp.ge.s32.totalorder %s17, 4
      %s27 = sphi 0, %s29
      %s30 = sphi 0, %s27
      %s31 = sphi 0, %s30
      %s47 = sphi 0, %s31
      %s51 = sphi 0, %s51
      %s53 = sphi 0, %s51
      %s54 = sphi 0, %s53
      %s68 = sphi 0, %s54
      %s72 = sphi 0, %s72
      %s74 = sphi 0, %s72
      %s75 = sphi 0, %s74
      %s89 = sphi 0, %s75
      %s95 = sphi 0, %s97
      %s98 = sphi 0, %s95
      %s99 = sphi 0, %s98
      %s115 = sphi 0, %s99
    $region4: #{tpu_custom_call.1} parent=1 // loop_header_branch
      %20 = sbr.rel (%p18) target = $region8
    $region5: #{tpu_custom_call.1} parent=1 // loop_body
      %s22 = ssub.s32 %s17, 1
      %s23 = ssub.s32 %s17, 2
      %s24 = sadd.s32 %s17, 1
      %s25 = ssub.s32 %s17, %s24
      %p26 = scmp.eq.s32.totalorder %s25, 0
      %s28 = sadd.s32 %s27, 1
      %s29 = scalar_select %p26, %s27, %s28
      %p32 = pneg %p26
      %p33 = scmp.eq.s32.totalorder %s17, 1
      %p34 = por %p32, %p33
      %p35 = scmp.ne.s32.totalorder %s27, %s30
      %p36 = scmp.eq.s32.totalorder %s17, 0
      %p37 = por %p35, %p36
      %p38 = scmp.ne.s32.totalorder %s27, %s30
      %p39 = scmp.eq.s32.totalorder %s22, 1
      %p40 = por %p38, %p39
      %p41 = scmp.ne.s32.totalorder %s30, %s31
      %p42 = scmp.eq.s32.totalorder %s22, 0
      %p43 = por %p41, %p42
      %p44 = scmp.ne.s32.totalorder %s30, %s31
      %p45 = scmp.eq.s32.totalorder %s23, 1
      %p46 = por %p44, %p45
      %p48 = scmp.ne.s32.totalorder %s31, %s47
      %p49 = scmp.eq.s32.totalorder %s23, 0
      %p50 = por %p48, %p49
      %s52 = sadd.s32 %s51, 1
      %p55 = scmp.eq.s32.totalorder %s17, 1
      %p56 = scmp.ne.s32.totalorder %s51, %s53
      %p57 = scmp.eq.s32.totalorder %s17, 0
      %p58 = por %p56, %p57
      %p59 = scmp.ne.s32.totalorder %s51, %s53
      %p60 = scmp.eq.s32.totalorder %s22, 1
      %p61 = por %p59, %p60
      %p62 = scmp.ne.s32.totalorder %s53, %s54
      %p63 = scmp.eq.s32.totalorder %s22, 0
      %p64 = por %p62, %p63
      %p65 = scmp.ne.s32.totalorder %s53, %s54
      %p66 = scmp.eq.s32.totalorder %s23, 1
      %p67 = por %p65, %p66
      %p69 = scmp.ne.s32.totalorder %s54, %s68
      %p70 = scmp.eq.s32.totalorder %s23, 0
      %p71 = por %p69, %p70
      %s73 = sadd.s32 %s72, 1
      %p76 = scmp.eq.s32.totalorder %s17, 1
      %p77 = scmp.ne.s32.totalorder %s72, %s74
      %p78 = scmp.eq.s32.totalorder %s17, 0
      %p79 = por %p77, %p78
      %p80 = scmp.ne.s32.totalorder %s72, %s74
      %p81 = scmp.eq.s32.totalorder %s22, 1
      %p82 = por %p80, %p81
      %p83 = scmp.ne.s32.totalorder %s74, %s75
      %p84 = scmp.eq.s32.totalorder %s22, 0
      %p85 = por %p83, %p84
      %p86 = scmp.ne.s32.totalorder %s74, %s75
      %p87 = scmp.eq.s32.totalorder %s23, 1
      %p88 = por %p86, %p87
      %p90 = scmp.ne.s32.totalorder %s75, %s89
      %p91 = scmp.eq.s32.totalorder %s23, 0
      %p92 = por %p90, %p91
      %s93 = ssub.s32 %s17, %s24
      %p94 = scmp.eq.s32.totalorder %s93, 0
      %s96 = sadd.s32 %s95, 1
      %s97 = scalar_select %p94, %s95, %s96
      %p100 = pneg %p94
      %p101 = scmp.eq.s32.totalorder %s17, 1
      %p102 = por %p100, %p101
      %p103 = scmp.ne.s32.totalorder %s95, %s98
      %p104 = scmp.eq.s32.totalorder %s17, 0
      %p105 = por %p103, %p104
      %p106 = scmp.ne.s32.totalorder %s95, %s98
      %p107 = scmp.eq.s32.totalorder %s22, 1
      %p108 = por %p106, %p107
      %p109 = scmp.ne.s32.totalorder %s98, %s99
      %p110 = scmp.eq.s32.totalorder %s22, 0
      %p111 = por %p109, %p110
      %p112 = scmp.ne.s32.totalorder %s98, %s99
      %p113 = scmp.eq.s32.totalorder %s23, 1
      %p114 = por %p112, %p113
      %p116 = scmp.ne.s32.totalorder %s99, %s115
      %p117 = scmp.eq.s32.totalorder %s23, 0
      %p118 = por %p116, %p117
      %p119 = scmp.le.s32.totalorder 1, %s17
      %p120 = scmp.lt.s32.totalorder %s17, 3
      %p121 = pnand %p119, %p120
      %p122 = pneg %p121
      // Predicated region
      $region9: #{tpu_custom_call.1} parent=5 // pred_check
        _
      $region10: #{tpu_custom_call.1} parent=5 // pred_check_branch
        %124 = sbr.rel (%p121) target = $region12
      $region11: #{tpu_custom_call.1} parent=5 // pred_region
        %s125 = ssub.s32 %s17, 1
        // Predicated region
        $region13: #{tpu_custom_call.1} parent=11 // pred_check
          %p126 = pneg %p64
        $region14: #{tpu_custom_call.1} parent=11 // pred_check_branch
          %128 = sbr.rel (%p126) target = $region16
        $region15: #{tpu_custom_call.1} parent=11 // pred_region
          %s130 = ssub.s32 16, 16
          %131 = vsyncadd [#allocation6], %s130
          %s133 = sshll.u32 %s1, 4
          %s134 = int_to_ptr.vmem [resolvable:$true] %s133
          %136 = dma.vmem_to_smem %s134, 16, [#allocation7], [#allocation6]
        $region16: #{tpu_custom_call.1} parent=11 // pred_fallthru
          _
        // Predicated region
        $region17: #{tpu_custom_call.1} parent=11 // pred_check
          %p137 = pneg %p85
        $region18: #{tpu_custom_call.1} parent=11 // pred_check_branch
          %139 = sbr.rel (%p137) target = $region20
        $region19: #{tpu_custom_call.1} parent=11 // pred_region
          _
        $region20: #{tpu_custom_call.1} parent=11 // pred_fallthru
          _
      $region12: #{tpu_custom_call.1} parent=5 // pred_fallthru
        _
      %p140 = scmp.lt.s32.totalorder %s17, 2
      // Predicated region
      $region21: #{tpu_custom_call.1} parent=5 // pred_check
        %p141 = pneg %p140
      $region22: #{tpu_custom_call.1} parent=5 // pred_check_branch
        %143 = sbr.rel (%p141) target = $region24
      $region23: #{tpu_custom_call.1} parent=5 // pred_region
        // Predicated region
        $region25: #{tpu_custom_call.1} parent=23 // pred_check
          %p144 = pneg %p37
        $region26: #{tpu_custom_call.1} parent=23 // pred_check_branch
          %146 = sbr.rel (%p144) target = $region28
        $region27: #{tpu_custom_call.1} parent=23 // pred_region
          %s147 = sand.u32 %s27, 1
          %s148 = scalar_lea.sflag [#allocation4], %s147
          %s149 = sand.u32 %s27, 1
          %s150 = smul.addr %s149, 4
          %s151 = scalar_lea.vmem [#allocation3], %s150
          %s153 = ssub.s32 64, 64
          %154 = vsyncadd %s148, %s153
          %s155 = smul.addr %s17, 64
          %s156 = scalar_lea.hbm %s0, %s155
          %s158 = sshll.u32 %s151, 4
          %s159 = int_to_ptr.vmem [resolvable:$true] %s158
          %161 = dma.hbm_to_vmem [thread:$0]  %s156, 64, %s159, %s148
        $region28: #{tpu_custom_call.1} parent=23 // pred_fallthru
          _
      $region24: #{tpu_custom_call.1} parent=5 // pred_fallthru
        _
      %p162 = scmp.le.s32.totalorder 1, %s17
      %p163 = scmp.lt.s32.totalorder %s17, 3
      %p164 = pnand %p162, %p163
      %p165 = pneg %p164
      // Predicated region
      $region29: #{tpu_custom_call.1} parent=5 // pred_check
        _
      $region30: #{tpu_custom_call.1} parent=5 // pred_check_branch
        %167 = sbr.rel (%p164) target = $region32
      $region31: #{tpu_custom_call.1} parent=5 // pred_region
        %s168 = ssub.s32 %s17, 1
        %s169 = sand.u32 %s30, 1
        %s170 = scalar_lea.sflag [#allocation4], %s169
        %s171 = sand.u32 %s30, 1
        %s172 = smul.addr %s171, 4
        %s173 = scalar_lea.vmem [#allocation3], %s172
        // Predicated region
        $region33: #{tpu_custom_call.1} parent=31 // pred_check
          %p174 = pneg %p43
        $region34: #{tpu_custom_call.1} parent=31 // pred_check_branch
          %176 = sbr.rel (%p174) target = $region36
        $region35: #{tpu_custom_call.1} parent=31 // pred_region
          %177 = dma.done %s170, 64
        $region36: #{tpu_custom_call.1} parent=31 // pred_fallthru
          _
        // Predicated region
        $region37: #{tpu_custom_call.1} parent=31 // pred_check
          %p178 = pneg %p64
        $region38: #{tpu_custom_call.1} parent=31 // pred_check_branch
          %180 = sbr.rel (%p178) target = $region40
        $region39: #{tpu_custom_call.1} parent=31 // pred_region
          %181 = dma.done [#allocation6], 16
        $region40: #{tpu_custom_call.1} parent=31 // pred_fallthru
          _
        %182 = sfence
        %s183 = sand.u32 %s30, 1
        %s184 = scalar_lea.sflag [#allocation4], %s183
        %s185 = sand.u32 %s30, 1
        %s186 = smul.addr %s185, 4
        %s187 = scalar_lea.vmem [#allocation3], %s186
        %p188 = pneg %p43
        %p189 = pneg %p40
        %p190 = pneg %p64
        %p191 = pneg %p61
        %p192 = pneg %p85
        %p193 = pneg %p82
        %p194 = pneg %p111
        %p195 = pneg %p108
        %s196 = sand.u32 %s98, 1
        %s197 = scalar_lea.sflag [#allocation5], %s196
        %s198 = sand.u32 %s98, 1
        %s199 = smul.addr %s198, 4
        %s200 = scalar_lea.vmem [#allocation8], %s199
        %v201 = vld [vmem:[%s173] sm:$0xf]
        %vm202 = vcmask 125952
        %v203 = vsel %vm202, %v201, 0.0
        %v204 = vrot.slane %v203, 4
        %v205 = vadd.f32 %v203, %v204
        %v206 = vrot.slane %v205, 2
        %v207 = vadd.f32 %v205, %v206
        %v208 = vrot.slane %v207, 1
        %v209 = vadd.f32 %v207, %v208
        %v210 = vrcp.pop 4.0
        %v211 = vmul.f32 %v209, %v210
        %v212 = vsel %vm202, %v201, -inf
        %v213 = vrot.slane %v212, 4
        %v214 = vmax.f32 %v212, %v213
        %v215 = vrot.slane %v214, 2
        %v216 = vmax.f32 %v214, %v215
        %v217 = vrot.slane %v216, 1
        %v218 = vmax.f32 %v216, %v217
        %s219 = sld [smem:[#allocation7]]
        %s220 = sld [smem:[#allocation7 + $0x1]]
        %s221 = sld [smem:[#allocation7 + $0x2]]
        %s222 = sld [smem:[#allocation7 + $0x3]]
        %s223 = sld [smem:[#allocation7 + $0x4]]
        %s224 = sld [smem:[#allocation7 + $0x5]]
        %s225 = sld [smem:[#allocation2]]
        %227 = vrot.lane.b32.xlu0 %v211, 1
        %v228 = vpop.permute.xlu0 %227
        %vm230 = vcmask 7168
        %v231 = vsel %vm230, 0.0, %v228
        %v232 = vstv %s219
        %v233 = vmul.f32 %v232, %v231
        %v234 = vstv %s220
        %v235 = vmul.f32 %v234, %v211
        %v236 = vadd.f32 %v233, %v235
        %237 = vrot.lane.b32.xlu0 %v211, 127
        %v238 = vpop.permute.xlu0 %237
        %vm240 = vcmask 121856
        %v241 = vsel %vm240, %v238, 0.0
        %v242 = vstv %s221
        %v243 = vmul.f32 %v242, %v241
        %v244 = vadd.f32 %v236, %v243
        %246 = vrot.lane.b32.xlu0 %v218, 1
        %v247 = vpop.permute.xlu0 %246
        %v249 = vsel %vm230, 0.0, %v247
        %v250 = vstv %s222
        %v251 = vmul.f32 %v250, %v249
        %v252 = vadd.f32 %v244, %v251
        %v253 = vstv %s223
        %v254 = vmul.f32 %v253, %v218
        %v255 = vadd.f32 %v252, %v254
        %256 = vrot.lane.b32.xlu0 %v218, 127
        %v257 = vpop.permute.xlu0 %256
        %v259 = vsel %vm240, %v257, 0.0
        %v260 = vstv %s224
        %v261 = vmul.f32 %v260, %v259
        %v262 = vadd.f32 %v255, %v261
        %v263 = vstv %s225
        %v264 = vadd.f32 %v262, %v263
        %v265 = vxor.u32 %v264, 2147483648
        %v266 = vmul.f32 %v265, 1.442695
        %v267 = vpow.pop %v266
        %v268 = vadd.f32 %v267, 1.0
        %v269 = vrcp.pop %v268
        %v270 = vmul.f32 1.0, %v269
        %v271 = vlaneseq
        %v272 = vshrl.u32 %v271, 7
        %v273 = vsub.s32 0, %v272
        %v274 = vrot.slane %v270, %v273
        %v275 = vmul.f32 %v201, %v274
        %276 = vst.msk [vmem:[%s200] sm:$0xf] %vm202, %v275
        %s277 = sand.u32 %s98, 1
        %s278 = scalar_lea.sflag [#allocation5], %s277
        %s279 = sand.u32 %s98, 1
        %s280 = smul.addr %s279, 4
        %s281 = scalar_lea.vmem [#allocation8], %s280
        // Predicated region
        $region41: #{tpu_custom_call.1} parent=31 // pred_check
          %p282 = pneg %p108
        $region42: #{tpu_custom_call.1} parent=31 // pred_check_branch
          %284 = sbr.rel (%p282) target = $region44
        $region43: #{tpu_custom_call.1} parent=31 // pred_region
          %s286 = ssub.s32 64, 64
          %287 = vsyncadd %s278, %s286
          %s288 = smul.addr %s22, 64
          %s289 = scalar_lea.hbm %s3, %s288
          %s291 = sshll.u32 %s281, 4
          %s292 = int_to_ptr.vmem [resolvable:$true] %s291
          %294 = dma.vmem_to_hbm [thread:$0]  %s292, 64, %s289, %s278
        $region44: #{tpu_custom_call.1} parent=31 // pred_fallthru
          _
      $region32: #{tpu_custom_call.1} parent=5 // pred_fallthru
        _
      %p295 = scmp.le.s32.totalorder 2, %s17
      // Predicated region
      $region45: #{tpu_custom_call.1} parent=5 // pred_check
        %p296 = pneg %p295
      $region46: #{tpu_custom_call.1} parent=5 // pred_check_branch
        %298 = sbr.rel (%p296) target = $region48
      $region47: #{tpu_custom_call.1} parent=5 // pred_region
        %s299 = ssub.s32 %s17, 2
        // Predicated region
        $region49: #{tpu_custom_call.1} parent=47 // pred_check
          %p300 = pneg %p114
        $region50: #{tpu_custom_call.1} parent=47 // pred_check_branch
          %302 = sbr.rel (%p300) target = $region52
        $region51: #{tpu_custom_call.1} parent=47 // pred_region
          %s303 = sand.u32 %s99, 1
          %s304 = scalar_lea.sflag [#allocation5], %s303
          %s305 = sand.u32 %s99, 1
          %s306 = smul.addr %s305, 4
          %s307 = scalar_lea.vmem [#allocation8], %s306
          %308 = dma.done %s304, 64
        $region52: #{tpu_custom_call.1} parent=47 // pred_fallthru
          _
      $region48: #{tpu_custom_call.1} parent=5 // pred_fallthru
        _
    $region6: #{tpu_custom_call.1} parent=1 // loop_footer
      %s21 = sadd.s32 1, %s17
    $region7: #{tpu_custom_call.1} parent=1 // loop_footer_branch
      %16 = sbr.rel target = $region3
    $region8: #{tpu_custom_call.1} parent=1 // loop_exit
      _
    %309 = vsyncpa [#allocation4], 1
    %s310 = scalar_lea.sflag [#allocation4], 1
    %311 = vsyncpa %s310, 1
    %312 = vsyncpa [#allocation5], 1
    %s313 = scalar_lea.sflag [#allocation5], 1
    %314 = vsyncpa %s313, 1
    %315 = vsyncpa [#allocation6], 1
    %s316 = scalar_lea.sflag [#allocation6], 1
    %317 = vsyncpa %s316, 1

</llo_original>
